<compile_context>
chip_gen: v7x
topology: tpu7x:2x2x1
jax: 0.10.0
libtpu: 0.0.40
codegen_flags: <defaults>
</compile_context>

<pallas_src>
import jax
import jax.numpy as jnp
from jax.experimental import pallas as pl
from jax.experimental.pallas import tpu as pltpu

LEAKY_SLOPE = 0.01  # torch.nn.LeakyReLU default negative_slope


def _round_up(x, m):
    return (x + m - 1) // m * m


def _pad_to(x, shape):
    pads = tuple((0, t - s) for s, t in zip(x.shape, shape))
    if all(p == (0, 0) for p in pads):
        return x  # already aligned: no pad op emitted
    return jnp.pad(x, pads)


def _pick_tile(padded_extent, candidates):
    for c in candidates:
        if padded_extent % c == 0:
            return c
    return padded_extent


# ---------------------------------------------------------------------------
# Kernels
# ---------------------------------------------------------------------------
def _resident_kernel(x_ref, w_ref, b_ref, o_ref):
    # x_ref: (tm, dp) input dtype   w_ref: (dp, gp) bf16 (VMEM-resident)
    # b_ref: (1, gp)  f32           o_ref: (tm, gp)
    y = jnp.dot(
        x_ref[...].astype(jnp.bfloat16), w_ref[...],
        preferred_element_type=jnp.float32,
    ) + b_ref[...]
    # LeakyReLU (0 < slope < 1): max(y, slope*y)
    o_ref[...] = jnp.maximum(y, LEAKY_SLOPE * y).astype(o_ref.dtype)


def _tiled_kernel(x_ref, w_ref, b_ref, o_ref, acc_ref):
    # x_ref: (tm, tk)   w_ref: (tk, tn) bf16   b_ref: (1, tn) f32
    # o_ref: (tm, tn)   acc_ref: (tm, tn) f32 scratch across the K axis.
    @pl.when(pl.program_id(2) == 0)
    def _init():
        # Initialize with the broadcast bias -> no finalize add needed.
        acc_ref[...] = jnp.broadcast_to(b_ref[...], acc_ref.shape)

    acc_ref[...] += jnp.dot(
        x_ref[...].astype(jnp.bfloat16), w_ref[...],
        preferred_element_type=jnp.float32,
    )

    @pl.when(pl.program_id(2) == pl.num_programs(2) - 1)
    def _finalize():
        y = acc_ref[...]
        o_ref[...] = jnp.maximum(y, LEAKY_SLOPE * y).astype(o_ref.dtype)


# ---------------------------------------------------------------------------
# Module wrapper (hoists all weight prep out of the per-call path)
# ---------------------------------------------------------------------------
def make_global_dense_encoder(weight, bias, *, seq_length, hidden_size,
                              out_dtype=None,
                              vmem_budget_bytes=48 * 1024 * 1024):
    """weight: (G, D) in torch Linear layout, bias: (G,).  Returns a jitted
    callable: hidden_states (B, S, H) -> (B, G) = LeakyReLU(flat @ W^T + b)."""
    G, D = weight.shape
    assert D == seq_length * hidden_size, "in_features must equal seq_length*hidden_size"
    assert bias.shape == (G,)

    # Lane-/MXU-friendly padded extents (multiples of 256 when large enough).
    dp = _round_up(D, 256) if D >= 256 else _round_up(D, 128)
    gp = _round_up(G, 256) if G >= 256 else _round_up(G, 128)

    # One-time weight prep: transpose to (D, G), pad, cast to bf16.
    w_p = _pad_to(jnp.asarray(weight, jnp.float32).T, (dp, gp)).astype(jnp.bfloat16)
    b_p = _pad_to(jnp.asarray(bias, jnp.float32), (gp,)).reshape(1, gp)

    def _forward_resident(x, B, out_dt, tm):
        bp = _round_up(B, tm)
        x_p = _pad_to(x, (bp, dp))
        x_bytes = x_p.dtype.itemsize
        o_bytes = jnp.dtype(out_dt).itemsize
        vmem_need = (2 * dp * gp * 2            # resident W (worst-case 2 bufs)
                     + 2 * tm * dp * x_bytes    # double-buffered x tiles
                     + 2 * tm * gp * o_bytes    # double-buffered out tiles
                     + 2 * gp * 4)              # bias
        out_p = pl.pallas_call(
            _resident_kernel,
            out_shape=jax.ShapeDtypeStruct((bp, gp), out_dt),
            grid_spec=pltpu.PrefetchScalarGridSpec(
                num_scalar_prefetch=0,
                grid=(bp // tm,),
                in_specs=[
                    pl.BlockSpec((tm, dp), lambda i: (i, 0)),   # x streams
                    pl.BlockSpec((dp, gp), lambda i: (0, 0)),   # W: DMA'd once
                    pl.BlockSpec((1, gp), lambda i: (0, 0)),    # bias: DMA'd once
                ],
                out_specs=pl.BlockSpec((tm, gp), lambda i: (i, 0)),
            ),
            compiler_params=pltpu.CompilerParams(
                dimension_semantics=("parallel",),
                vmem_limit_bytes=min(max(int(vmem_need * 1.25), 32 << 20), 64 << 20),
            ),
            cost_estimate=pl.CostEstimate(
                flops=2 * bp * dp * gp,
                transcendentals=0,
                bytes_accessed=(x_p.size * x_bytes + dp * gp * 2 + gp * 4
                                + bp * gp * o_bytes),
            ),
        )(x_p, w_p, b_p)
        return out_p[:B, :G]

    def _forward_tiled(x, B, out_dt):
        tm = min(512, _round_up(B, 16))
        bp = _round_up(B, tm)
        tn = _pick_tile(gp, (512, 256, 128))
        tk = _pick_tile(dp, (2048, 1024, 512, 256, 128))
        x_p = _pad_to(x, (bp, dp))
        x_bytes = x_p.dtype.itemsize
        o_bytes = jnp.dtype(out_dt).itemsize
        vmem_need = (2 * tm * tk * x_bytes + 3 * tk * tn * 2
                     + 2 * tm * tn * o_bytes + tm * tn * 4 + 2 * tn * 4)
        out_p = pl.pallas_call(
            _tiled_kernel,
            out_shape=jax.ShapeDtypeStruct((bp, gp), out_dt),
            grid_spec=pltpu.PrefetchScalarGridSpec(
                num_scalar_prefetch=0,
                grid=(bp // tm, gp // tn, dp // tk),
                in_specs=[
                    pl.BlockSpec((tm, tk), lambda i, j, k: (i, k)),
                    pl.BlockSpec((tk, tn), lambda i, j, k: (k, j),
                                 pipeline_mode=pl.Buffered(3)),   # deeper W stream
                    pl.BlockSpec((1, tn), lambda i, j, k: (0, j)),
                ],
                out_specs=pl.BlockSpec((tm, tn), lambda i, j, k: (i, j)),
                scratch_shapes=[pltpu.VMEM((tm, tn), jnp.float32)],
            ),
            compiler_params=pltpu.CompilerParams(
                dimension_semantics=("parallel", "parallel", "arbitrary"),
                vmem_limit_bytes=min(max(int(vmem_need * 1.5), 32 << 20), 64 << 20),
            ),
            cost_estimate=pl.CostEstimate(
                flops=2 * bp * dp * gp,
                transcendentals=0,
                bytes_accessed=(x_p.size * x_bytes * (gp // tn)   # x re-read per N tile
                                + dp * gp * 2 * (bp // tm)        # W re-read per M tile
                                + gp * 4
                                + bp * gp * o_bytes),
            ),
        )(x_p, w_p, b_p)
        return out_p[:B, :G]

    def forward(hidden_states):
        B, S, H = hidden_states.shape
        assert S == seq_length and H == hidden_size, "unexpected (seq, hidden) shape"
        out_dt = out_dtype if out_dtype is not None else hidden_states.dtype
        x = hidden_states.reshape(B, D)
        x_bytes = jnp.dtype(x.dtype).itemsize
        o_bytes = jnp.dtype(out_dt).itemsize

        # Weight-resident path if the full padded bf16 W fits the VMEM budget
        # (conservative so a v6e-derived plan still fits v7x's 64 MiB).
        tm = min(512, _round_up(B, 16))

        def footprint(tm_):
            return (2 * dp * gp * 2 + 2 * tm_ * dp * x_bytes
                    + 2 * tm_ * gp * o_bytes + 2 * gp * 4)

        while tm > 16 and footprint(tm) > vmem_budget_bytes:
            tm = _round_up(tm // 2, 16)

        if footprint(tm) <= vmem_budget_bytes:
            return _forward_resident(x, B, out_dt, tm)
        return _forward_tiled(x, B, out_dt)

    return jax.jit(forward)


def _reference(hidden_states, weight, bias):
    B = hidden_states.shape[0]
    flat = hidden_states.reshape(B, -1)
    return jax.nn.leaky_relu(flat @ weight.T + bias, LEAKY_SLOPE)


if __name__ == "__main__":
    # Small shapes consistent with the module: batch=2, seq=8, hidden=32, global_dim=64.
    B, S, H, G = 2, 8, 32, 64
    D = S * H

    key = jax.random.PRNGKey(0)
    k_x, k_w, k_b = jax.random.split(key, 3)

    hidden_states = jax.random.normal(k_x, (B, S, H), dtype=jnp.float32)

    # PyTorch Linear init: weight (G, D), bias (G,) ~ U(-1/sqrt(D), 1/sqrt(D)).
    lim = 1.0 / jnp.sqrt(jnp.float32(D))
    weight = jax.random.uniform(k_w, (G, D), minval=-lim, maxval=lim, dtype=jnp.float32)
    bias = jax.random.uniform(k_b, (G,), minval=-lim, maxval=lim, dtype=jnp.float32)

    encoder = make_global_dense_encoder(weight, bias, seq_length=S, hidden_size=H)
    out = jax.block_until_ready(encoder(hidden_states))

    ref = _reference(hidden_states, weight, bias)
    assert out.shape == (B, G), f"bad output shape {out.shape}"
    # bf16 MXU inputs with f32 accumulation -> relaxed tolerance vs the f32 reference.
    assert jnp.allclose(out, ref, atol=5e-2, rtol=5e-2), "mismatch vs reference"

    print("KERNEL_OK")
</pallas_src>

<mosaic_0001>
module attributes {stable_mosaic.version = 11 : i64} {
  func.func @_resident_kernel(%arg0: i32, %arg1: memref<16x256xf32, #tpu.memory_space<vmem>>, %arg2: memref<256x128xbf16, #tpu.memory_space<vmem>>, %arg3: memref<1x128xf32, #tpu.memory_space<vmem>>, %arg4: memref<16x128xf32, #tpu.memory_space<vmem>>) attributes {dimension_semantics = [#tpu.dimension_semantics<parallel>], iteration_bounds = array<i64: 1>, scalar_prefetch = 0 : i64, scratch_operands = 0 : i64, tpu.core_type = #tpu.core_type<tc>, window_params = [{transform_indices = @transform_0, window_bounds = array<i64: 16, 256>}, {pipeline_mode = #tpu.pipeline_mode<synchronous>, transform_indices = @transform_1, window_bounds = array<i64: 256, 128>}, {pipeline_mode = #tpu.pipeline_mode<synchronous>, transform_indices = @transform_2, window_bounds = array<i64: 1, 128>}, {transform_indices = @transform_3, window_bounds = array<i64: 16, 128>}]} {
    %c0 = arith.constant 0 : index
    %c0_0 = arith.constant 0 : index
    %0 = vector.load %arg1[%c0, %c0_0] : memref<16x256xf32, #tpu.memory_space<vmem>>, vector<16x256xf32>
    %1 = arith.truncf %0 : vector<16x256xf32> to vector<16x256xbf16>
    %c0_1 = arith.constant 0 : index
    %c0_2 = arith.constant 0 : index
    %2 = vector.load %arg2[%c0_1, %c0_2] : memref<256x128xbf16, #tpu.memory_space<vmem>>, vector<256x128xbf16>
    %cst = arith.constant dense<0.000000e+00> : vector<16x128xf32>
    %3 = tpu.matmul %1, %2, %cst {dimension_numbers = #tpu.dot_dimension_numbers<[1], [0], [0], [1], [0, 0, 1, 1], [], []>} : vector<16x256xbf16>, vector<256x128xbf16>, vector<16x128xf32> -> vector<16x128xf32>
    %c0_3 = arith.constant 0 : index
    %c0_4 = arith.constant 0 : index
    %4 = vector.load %arg3[%c0_3, %c0_4] : memref<1x128xf32, #tpu.memory_space<vmem>>, vector<1x128xf32>
    %5 = vector.broadcast %4 : vector<1x128xf32> to vector<16x128xf32>
    %6 = arith.addf %3, %5 : vector<16x128xf32>
    %cst_5 = arith.constant 0.00999999977 : f32
    %7 = vector.broadcast %cst_5 : f32 to vector<16x128xf32>
    %8 = arith.mulf %7, %6 : vector<16x128xf32>
    %9 = arith.maximumf %6, %8 : vector<16x128xf32>
    %c0_6 = arith.constant 0 : index
    %c0_7 = arith.constant 0 : index
    %10 = vector.load %arg4[%c0_6, %c0_7] : memref<16x128xf32, #tpu.memory_space<vmem>>, vector<16x128xf32>
    tpu.vector_store %arg4[%c0_6, %c0_7], %9 {strides = array<i32>} : memref<16x128xf32, #tpu.memory_space<vmem>>, vector<16x128xf32>,
    return
  }
  func.func @transform_0(%arg0: i32) -> (i32, i32) {
    %c0_i32 = arith.constant 0 : i32
    %c0_i32_0 = arith.constant 0 : i32
    return %arg0, %c0_i32 : i32, i32
  }
  func.func @transform_1(%arg0: i32) -> (i32, i32) {
    %c0_i32 = arith.constant 0 : i32
    %c0_i32_0 = arith.constant 0 : i32
    %c0_i32_1 = arith.constant 0 : i32
    return %c0_i32, %c0_i32_0 : i32, i32
  }
  func.func @transform_2(%arg0: i32) -> (i32, i32) {
    %c0_i32 = arith.constant 0 : i32
    %c0_i32_0 = arith.constant 0 : i32
    %c0_i32_1 = arith.constant 0 : i32
    return %c0_i32, %c0_i32_0 : i32, i32
  }
  func.func @transform_3(%arg0: i32) -> (i32, i32) {
    %c0_i32 = arith.constant 0 : i32
    %c0_i32_0 = arith.constant 0 : i32
    return %arg0, %c0_i32 : i32, i32
  }
}

</mosaic_0001>

<llo_original>
// kernel: forward.1
$region0: #{forward.1}
  #allocation0 [shape = 'u32[]', space=smem, size = 0x4, offset = 0x4, fixed_abs, tag = 'smem constant byte address 0x4 - core index']
  #allocation1 [shape = 'u32[144,128]{1,0:T(1,128)}', space=vmem, size = 0x12000, scoped, tag = 'internal scratch']
  %s0 = inlined_call_operand.vmem [shape: f32[16,256], index: 0, kind: input, shape index: {}]
  %s1 = inlined_call_operand.hbm [shape: bf16[256,128], index: 1, kind: input, shape index: {}]
  %s2 = inlined_call_operand.vmem [shape: f32[1,128], index: 2, kind: input, shape index: {}]
  %s3 = inlined_call_operand.vmem [shape: f32[16,128], index: 3, kind: output, shape index: {}]
  %s4 = sld [smem:[#allocation0]]
  $region26: #{forward.1} parent=0
    _
  %s6 = ssub.s32 1, %s4
  %s7 = scalar_select 0, %s6, %s4
  $region1: #{forward.1} parent=0
    #allocation2 [shape = 'u8[65536]{0}', space=vmem, size = 0x10000, scoped, tag = 'input window, operand 1, single buffered']
    #allocation3 [shape = 's32[1]{0}', space=sflag, size = 0x4, scoped, tag = 'scoped memory for forward.1']
    %8 = vsyncpa [#allocation3], 0
    // Predicated region
    $region2: #{forward.1} parent=1 // pred_check
      _
    $region3: #{forward.1} parent=1 // pred_check_branch
      %10 = sbr.rel (0) target = $region5
    $region4: #{forward.1} parent=1 // pred_region
      _
    $region5: #{forward.1} parent=1 // pred_fallthru
      _
    // Predicated region
    $region6: #{forward.1} parent=1 // pred_check
      _
    $region7: #{forward.1} parent=1 // pred_check_branch
      %12 = sbr.rel (0) target = $region9
    $region8: #{forward.1} parent=1 // pred_region
      %s14 = ssub.s32 2048, 2048
      %15 = vsyncadd [#allocation3], %s14
      %s16 = sshll.u32 [#allocation2], 4
      %s17 = int_to_ptr.vmem [resolvable:$true] %s16
      %22 = dma.hbm_to_vmem [thread:$0]  %s1, 2048, %s17, [#allocation3], 64, 64, 4
    $region9: #{forward.1} parent=1 // pred_fallthru
      _
    // Predicated region
    $region10: #{forward.1} parent=1 // pred_check
      _
    $region11: #{forward.1} parent=1 // pred_check_branch
      %24 = sbr.rel (0) target = $region13
    $region12: #{forward.1} parent=1 // pred_region
      _
    $region13: #{forward.1} parent=1 // pred_fallthru
      _
    // Predicated region
    $region14: #{forward.1} parent=1 // pred_check
      _
    $region15: #{forward.1} parent=1 // pred_check_branch
      %26 = sbr.rel (0) target = $region17
    $region16: #{forward.1} parent=1 // pred_region
      %27 = dma.done [#allocation3], 2048
    $region17: #{forward.1} parent=1 // pred_fallthru
      _
    %v29 = vld [vmem:[%s0] sm:$0xff]
    %v30 = vld [vmem:[%s0 + $0x8] sm:$0xff]
    %v31 = vld [vmem:[%s0 + $0x10] sm:$0xff]
    %v32 = vld [vmem:[%s0 + $0x18] sm:$0xff]
    %v33 = vpack.c.bf16 %v31, %v29
    %v34 = vpack.c.bf16 %v32, %v30
    %v35 = vld [vmem:[#allocation2] sm:$0xf]
    %v36 = vld [vmem:[#allocation2 + $0x4] sm:$0xf]
    %v37 = vld [vmem:[#allocation2 + $0x8] sm:$0xf]
    %v38 = vld [vmem:[#allocation2 + $0xc] sm:$0xf]
    %v39 = vld [vmem:[#allocation2 + $0x10] sm:$0xf]
    %v40 = vld [vmem:[#allocation2 + $0x14] sm:$0xf]
    %v41 = vld [vmem:[#allocation2 + $0x18] sm:$0xf]
    %v42 = vld [vmem:[#allocation2 + $0x1c] sm:$0xf]
    %v43 = vld [vmem:[#allocation2 + $0x20] sm:$0xf]
    %v44 = vld [vmem:[#allocation2 + $0x24] sm:$0xf]
    %v45 = vld [vmem:[#allocation2 + $0x28] sm:$0xf]
    %v46 = vld [vmem:[#allocation2 + $0x2c] sm:$0xf]
    %v47 = vld [vmem:[#allocation2 + $0x30] sm:$0xf]
    %v48 = vld [vmem:[#allocation2 + $0x34] sm:$0xf]
    %v49 = vld [vmem:[#allocation2 + $0x38] sm:$0xf]
    %v50 = vld [vmem:[#allocation2 + $0x3c] sm:$0xf]
    %v51 = vld [vmem:[#allocation2 + $0x40] sm:$0xf]
    %v52 = vld [vmem:[#allocation2 + $0x44] sm:$0xf]
    %v53 = vld [vmem:[#allocation2 + $0x48] sm:$0xf]
    %v54 = vld [vmem:[#allocation2 + $0x4c] sm:$0xf]
    %v55 = vld [vmem:[#allocation2 + $0x50] sm:$0xf]
    %v56 = vld [vmem:[#allocation2 + $0x54] sm:$0xf]
    %v57 = vld [vmem:[#allocation2 + $0x58] sm:$0xf]
    %v58 = vld [vmem:[#allocation2 + $0x5c] sm:$0xf]
    %v59 = vld [vmem:[#allocation2 + $0x60] sm:$0xf]
    %v60 = vld [vmem:[#allocation2 + $0x64] sm:$0xf]
    %v61 = vld [vmem:[#allocation2 + $0x68] sm:$0xf]
    %v62 = vld [vmem:[#allocation2 + $0x6c] sm:$0xf]
    %v63 = vld [vmem:[#allocation2 + $0x70] sm:$0xf]
    %v64 = vld [vmem:[#allocation2 + $0x74] sm:$0xf]
    %v65 = vld [vmem:[#allocation2 + $0x78] sm:$0xf]
    %v66 = vld [vmem:[#allocation2 + $0x7c] sm:$0xf]
    %v67 = vld [vmem:[%s2] sm:$0x1]
    %v69 = vlaneseq
    %v70 = vshrl.u32 %v69, 7
    %v71 = vsub.s32 0, %v70
    %v72 = vrot.slane %v67, %v71
    %v106 = vunpack.c.l.b16 %v35
    %v107 = vunpack.c.l.b16 %v36
    %v108 = vunpack.c.l.b16 %v37
    %v109 = vunpack.c.l.b16 %v38
    %v110 = vunpack.c.l.b16 %v39
    %v111 = vunpack.c.l.b16 %v40
    %v112 = vunpack.c.l.b16 %v41
    %v113 = vunpack.c.l.b16 %v42
    %v114 = vunpack.c.l.b16 %v43
    %v115 = vunpack.c.l.b16 %v44
    %v116 = vunpack.c.l.b16 %v45
    %v117 = vunpack.c.l.b16 %v46
    %v118 = vunpack.c.l.b16 %v47
    %v119 = vunpack.c.l.b16 %v48
    %v120 = vunpack.c.l.b16 %v49
    %v121 = vunpack.c.l.b16 %v50
    %v122 = vunpack.c.l.b16 %v51
    %v123 = vunpack.c.l.b16 %v52
    %v124 = vunpack.c.l.b16 %v53
    %v125 = vunpack.c.l.b16 %v54
    %v126 = vunpack.c.l.b16 %v55
    %v127 = vunpack.c.l.b16 %v56
    %v128 = vunpack.c.l.b16 %v57
    %v129 = vunpack.c.l.b16 %v58
    %v130 = vunpack.c.l.b16 %v59
    %v131 = vunpack.c.l.b16 %v60
    %v132 = vunpack.c.l.b16 %v61
    %v133 = vunpack.c.l.b16 %v62
    %v134 = vunpack.c.l.b16 %v63
    %v135 = vunpack.c.l.b16 %v64
    %v136 = vunpack.c.l.b16 %v65
    %v137 = vunpack.c.l.b16 %v66
    %v138 = vpack.c.b16 %v107, %v106
    %v139 = vpack.c.b16 %v109, %v108
    %v140 = vpack.c.b16 %v111, %v110
    %v141 = vpack.c.b16 %v113, %v112
    %v142 = vpack.c.b16 %v115, %v114
    %v143 = vpack.c.b16 %v117, %v116
    %v144 = vpack.c.b16 %v119, %v118
    %v145 = vpack.c.b16 %v121, %v120
    %v146 = vpack.c.b16 %v123, %v122
    %v147 = vpack.c.b16 %v125, %v124
    %v148 = vpack.c.b16 %v127, %v126
    %v149 = vpack.c.b16 %v129, %v128
    %v150 = vpack.c.b16 %v131, %v130
    %v151 = vpack.c.b16 %v133, %v132
    %v152 = vpack.c.b16 %v135, %v134
    %v153 = vpack.c.b16 %v137, %v136
    %170 = vmatprep.subr.bf16.mxu0 0
    %171 = vmatpush1.bf16.msra.mxu0 %v138
    %172 = vmatprep.subr.bf16.mxu0 0
    %173 = vmatpush1.bf16.msra.mxu0 %v139
    %174 = vmatprep.subr.bf16.mxu0 0
    %175 = vmatpush1.bf16.msra.mxu0 %v140
    %176 = vmatprep.subr.bf16.mxu0 0
    %177 = vmatpush1.bf16.msra.mxu0 %v141
    %178 = vmatprep.subr.bf16.mxu0 0
    %179 = vmatpush1.bf16.msra.mxu0 %v142
    %180 = vmatprep.subr.bf16.mxu0 0
    %181 = vmatpush1.bf16.msra.mxu0 %v143
    %182 = vmatprep.subr.bf16.mxu0 0
    %183 = vmatpush1.bf16.msra.mxu0 %v144
    %184 = vmatprep.subr.bf16.mxu0 0
    %185 = vmatpush1.bf16.msra.mxu0 %v145
    %186 = vmatprep.subr.bf16.mxu0 0
    %187 = vmatpush1.bf16.msra.mxu0 %v146
    %188 = vmatprep.subr.bf16.mxu0 0
    %189 = vmatpush1.bf16.msra.mxu0 %v147
    %190 = vmatprep.subr.bf16.mxu0 0
    %191 = vmatpush1.bf16.msra.mxu0 %v148
    %192 = vmatprep.subr.bf16.mxu0 0
    %193 = vmatpush1.bf16.msra.mxu0 %v149
    %194 = vmatprep.subr.bf16.mxu0 0
    %195 = vmatpush1.bf16.msra.mxu0 %v150
    %196 = vmatprep.subr.bf16.mxu0 0
    %197 = vmatpush1.bf16.msra.mxu0 %v151
    %198 = vmatprep.subr.bf16.mxu0 0
    %199 = vmatpush1.bf16.msra.mxu0 %v152
    %200 = vmatprep.subr.bf16.mxu0 0
    %201 = vmatpush1.bf16.msra.mxu0 %v153
    %202 = vmatprep.mubr.bf16.mxu0 %v34
    %203 = vmatmul.mubr.bf16.gmra.mrb[0].mxu0 %v33
    %v204 = vpop.f32.mrb[0].mxu0
    %v205 = vadd.f32 %v72, %v204
    %v206 = vpop.f32.mrb[0].mxu0
    %v207 = vpop.f32.mrb[0].mxu0
    %v208 = vadd.f32 %v72, %v207
    %v209 = vpop.f32.mrb[0].mxu0
    %210 = vdwg.mxu0
    %v211 = vmul.f32 %v205, 0.01
    %v212 = vmul.f32 %v208, 0.01
    %v213 = vmax.f32 %v205, %v211
    %v214 = vmax.f32 %v208, %v212
    %215 = vst [vmem:[%s3] sm:$0xff] %v213
    %216 = vst [vmem:[%s3 + $0x8] sm:$0xff] %v214
    // Predicated region
    $region18: #{forward.1} parent=1 // pred_check
      _
    $region19: #{forward.1} parent=1 // pred_check_branch
      %218 = sbr.rel (0) target = $region21
    $region20: #{forward.1} parent=1 // pred_region
      _
    $region21: #{forward.1} parent=1 // pred_fallthru
      _
    // Predicated region
    $region22: #{forward.1} parent=1 // pred_check
      _
    $region23: #{forward.1} parent=1 // pred_check_branch
      %220 = sbr.rel (0) target = $region25
    $region24: #{forward.1} parent=1 // pred_region
      _
    $region25: #{forward.1} parent=1 // pred_fallthru
      _
    %221 = vsyncpa [#allocation3], 1

</llo_original>
